<compile_context>
chip_gen: v6e
topology: v6e:2x2x1
jax: 0.10.0
libtpu: 0.0.40
codegen_flags: <defaults>
</compile_context>

<pallas_src>
import jax
import jax.numpy as jnp
import numpy as np
from jax.experimental import pallas as pl
from jax.experimental.pallas import tpu as pltpu


def _round_up(x, m):
    return ((x + m - 1) // m) * m


def _choose_pixel_tile(p, stream_bytes_per_row, fixed_bytes, budget_bytes, cap=2048):
    """Largest multiple-of-8 pixel tile that (a) keeps the per-step VMEM
    footprint (double-buffered x/out streams + resident operator) under the
    budget, (b) is <= cap, and (c) leaves >= 2 grid steps along the pixel axis
    when the extent allows (v7x megacore)."""
    avail = max(budget_bytes - fixed_bytes, 8 * stream_bytes_per_row)
    pt = min(cap, avail // stream_bytes_per_row)
    if p > 8:
        pt = min(pt, _round_up(-(-p // 2), 8))   # ceil(p/2) rounded to 8
    return int(max(8, (pt // 8) * 8))


# ---------------------------------------------------------------------------
# Fused kernel: one wide matmul (MXU) + bias + ReLU per (graph, pixel-tile).
#   x_ref    : (pt, Kin_pad)            lanes = (channel, node)
#   b_ref    : (1, Kin_pad, Kout_pad)   per-graph fused operator
#   bias_ref : (1, 8, Kout_pad)         bias[o] repeated per node (8 rows for
#                                       a clean (8,128)-aligned block)
#   o_ref    : (1, pt, Kout_pad)        lanes = (out_channel, node)
# ---------------------------------------------------------------------------
def _fused_kernel(x_ref, b_ref, bias_ref, o_ref):
    acc = jnp.dot(x_ref[...], b_ref[0], preferred_element_type=jnp.float32)
    acc = acc + bias_ref[0][0:1, :]
    o_ref[0] = jnp.maximum(acc, 0.0).astype(o_ref.dtype)


def _mgc_fused_pallas(x_rows, b_op, bias_rows, *, pixel_tile, out_dtype,
                      vmem_limit_bytes):
    p_pad, kin_pad = x_rows.shape
    num_graphs, _, kout_pad = b_op.shape
    grid = (num_graphs, p_pad // pixel_tile)

    flops = 2 * num_graphs * p_pad * kin_pad * kout_pad
    bytes_accessed = int(
        num_graphs * x_rows.size * x_rows.dtype.itemsize      # x read per graph
        + b_op.size * b_op.dtype.itemsize                      # operator
        + bias_rows.size * bias_rows.dtype.itemsize            # bias
        + num_graphs * p_pad * kout_pad * jnp.dtype(out_dtype).itemsize)  # out

    return pl.pallas_call(
        _fused_kernel,
        out_shape=jax.ShapeDtypeStruct((num_graphs, p_pad, kout_pad), out_dtype),
        grid=grid,
        in_specs=[
            pl.BlockSpec((pixel_tile, kin_pad), lambda g, i: (i, 0)),
            # constant along the inner (pixel) axis -> fetched once per graph
            pl.BlockSpec((1, kin_pad, kout_pad), lambda g, i: (g, 0, 0)),
            pl.BlockSpec((1, 8, kout_pad), lambda g, i: (g, 0, 0)),
        ],
        out_specs=pl.BlockSpec((1, pixel_tile, kout_pad), lambda g, i: (g, i, 0)),
        compiler_params=pltpu.CompilerParams(
            dimension_semantics=("parallel", "parallel"),
            vmem_limit_bytes=vmem_limit_bytes),
        cost_estimate=pl.CostEstimate(flops=flops, transcendentals=0,
                                      bytes_accessed=bytes_accessed),
    )(x_rows, b_op, bias_rows)


# ---------------------------------------------------------------------------
# Wrapper: build the fused per-graph operator B_g and call the kernel.
# ---------------------------------------------------------------------------
def _build_fused_operator(support_list, weights, *, c_in, c_out, v, order):
    """B_g[(c,v),(o,w)] = W0_g[o,c]*I[v,w] + sum_f W_{g,f}[o,c]*(A_s^q)^T[v,w]."""
    num_graphs = len(support_list)
    support_len = len(support_list[0])
    n_feat = 1 + support_len * (order - 1)
    hi = jax.lax.Precision.HIGHEST

    mats = []
    for support in support_list:
        assert len(support) == support_len
        ms = [jnp.eye(v, dtype=jnp.float32)]
        for a in support:
            at = jnp.transpose(a).astype(jnp.float32)   # apply as x @ at  (== A x over nodes)
            cur = at
            for _ in range(order - 1):
                ms.append(cur)
                cur = jnp.matmul(cur, at, precision=hi)
        mats.append(jnp.stack(ms))                       # (n_feat, v, v)
    m_all = jnp.stack(mats)                              # (G, n_feat, v, v)

    w_all = jnp.stack(weights).astype(jnp.float32)       # (G, c_out, n_feat*c_in)
    assert w_all.shape == (num_graphs, c_out, n_feat * c_in)
    w_split = w_all.reshape(num_graphs, c_out, n_feat, c_in)

    b_op = jnp.einsum('gofc,gfvw->gcvow', w_split, m_all, precision=hi)
    return b_op.reshape(num_graphs, c_in * v, c_out * v)


def mgc_forward(x, support_list, weights, biases, *, order=3,
                compute_dtype=jnp.bfloat16, out_dtype=jnp.float32,
                vmem_budget_bytes=40 * 2**20):
    """Pallas implementation of MGC.forward. Returns a list of (N, c_out, V, L)."""
    # TODO(synk): F.dropout path not implemented (module default dropout=0.0).
    n, c_in, v, l = x.shape
    num_graphs = len(support_list)
    c_out = weights[0].shape[0]
    p = n * l
    kin, kout = c_in * v, c_out * v
    kin_pad, kout_pad = _round_up(kin, 128), _round_up(kout, 128)
    in_item = jnp.dtype(compute_dtype).itemsize
    out_item = jnp.dtype(out_dtype).itemsize

    # Fused per-graph operator (built in f32, streamed in compute_dtype).
    b_op = _build_fused_operator(support_list, weights,
                                 c_in=c_in, c_out=c_out, v=v, order=order)
    b_op = jnp.pad(b_op, ((0, 0), (0, kin_pad - kin), (0, kout_pad - kout)))
    b_op = b_op.astype(compute_dtype)

    # bias[o] repeated per node, padded, replicated to 8 sublanes (f32 add).
    bias_flat = jnp.repeat(jnp.stack(biases).astype(jnp.float32), v, axis=-1)
    bias_flat = jnp.pad(bias_flat, ((0, 0), (0, kout_pad - kout)))
    bias_rows = jnp.broadcast_to(bias_flat[:, None, :], (num_graphs, 8, kout_pad))

    # x -> (P, Kin): rows = pixel (n*L + l), lanes = (channel, node).
    x_rows = jnp.transpose(x, (0, 3, 1, 2)).reshape(p, kin).astype(compute_dtype)

    # VMEM-budgeted pixel tile; pad P to a tile multiple (no full-dim fallback).
    stream_bytes_per_row = 2 * (kin_pad * in_item + kout_pad * out_item)   # dbl-buffered x + out
    fixed_bytes = 2 * kin_pad * kout_pad * in_item + 2 * 8 * kout_pad * 4  # operator + bias
    pt = _choose_pixel_tile(p, stream_bytes_per_row, fixed_bytes, vmem_budget_bytes)
    p_pad = _round_up(p, pt)
    x_rows = jnp.pad(x_rows, ((0, p_pad - p), (0, kin_pad - kin)))

    footprint = fixed_bytes + pt * stream_bytes_per_row
    vmem_limit = int(min(127 * 2**20, max(48 * 2**20, footprint + 8 * 2**20)))

    out = _mgc_fused_pallas(x_rows, b_op, bias_rows, pixel_tile=pt,
                            out_dtype=out_dtype, vmem_limit_bytes=vmem_limit)

    out = out[:, :p, :kout].reshape(num_graphs, n, l, c_out, v)
    return [jnp.transpose(out[g], (0, 2, 3, 1)) for g in range(num_graphs)]


# ---------------------------------------------------------------------------
# Pure-JAX reference matching the PyTorch MGC semantics.
# ---------------------------------------------------------------------------
def mgc_reference(x, support_list, weights, biases, *, order=3):
    hi = jax.lax.Precision.HIGHEST
    outs = []
    for i, support in enumerate(support_list):
        feats = [x]
        for A in support:
            x1 = jnp.einsum('ncvl,wv->ncwl', x, A, precision=hi)
            feats.append(x1)
            for _ in range(2, order):
                x1 = jnp.einsum('ncvl,wv->ncwl', x1, A, precision=hi)
                feats.append(x1)
        h = jnp.concatenate(feats, axis=1)               # (N, K, V, L)
        out = (jnp.einsum('nkvl,ok->novl', h, weights[i], precision=hi)
               + biases[i][None, :, None, None])
        outs.append(jnp.maximum(out, 0.0))
    return outs


if __name__ == "__main__":
    # Small deterministic config: N=2, C_in=4, V=16 nodes, L=8 time steps.
    N, C_IN, V, L = 2, 4, 16, 8
    C_OUT = 8
    NUM_GRAPHS, SUPPORT_LEN, ORDER = 2, 2, 3
    K = ((ORDER - 1) * SUPPORT_LEN + 1) * C_IN           # 5 * C_IN

    key = jax.random.PRNGKey(0)
    keys = jax.random.split(key, 16)

    x = jax.random.normal(keys[0], (N, C_IN, V, L), dtype=jnp.float32)

    support_list = []
    for i in range(NUM_GRAPHS):
        sup = []
        for j in range(SUPPORT_LEN):
            a = jax.random.uniform(keys[1 + i * SUPPORT_LEN + j], (V, V),
                                   dtype=jnp.float32)
            a = a / jnp.sum(a, axis=1, keepdims=True)    # row-normalized adjacency
            sup.append(a)
        support_list.append(sup)

    weights = [0.1 * jax.random.normal(keys[8 + i], (C_OUT, K), dtype=jnp.float32)
               for i in range(NUM_GRAPHS)]
    biases = [0.1 * jax.random.normal(keys[10 + i], (C_OUT,), dtype=jnp.float32)
              for i in range(NUM_GRAPHS)]

    refs = mgc_reference(x, support_list, weights, biases, order=ORDER)

    # f32 compute path: tight check.
    outs32 = jax.block_until_ready(
        mgc_forward(x, support_list, weights, biases, order=ORDER,
                    compute_dtype=jnp.float32))
    for o, r in zip(outs32, refs):
        assert o.shape == (N, C_OUT, V, L)
        np.testing.assert_allclose(np.asarray(o), np.asarray(r),
                                   rtol=2e-3, atol=2e-4)

    # Default (bf16 compute, f32 accumulation): looser tolerance.
    outs_bf16 = jax.block_until_ready(
        mgc_forward(x, support_list, weights, biases, order=ORDER))
    for o, r in zip(outs_bf16, refs):
        assert o.shape == (N, C_OUT, V, L)
        np.testing.assert_allclose(np.asarray(o), np.asarray(r),
                                   rtol=2e-2, atol=2e-2)

    print("KERNEL_OK")
</pallas_src>

<mosaic_0001>
module attributes {stable_mosaic.version = 11 : i64} {
  func.func @_fused_kernel(%arg0: i32, %arg1: i32, %arg2: memref<8x128xf32, #tpu.memory_space<vmem>>, %arg3: memref<1x128x128xf32, #tpu.memory_space<vmem>>, %arg4: memref<1x8x128xf32, #tpu.memory_space<vmem>>, %arg5: memref<1x8x128xf32, #tpu.memory_space<vmem>>) attributes {dimension_semantics = [#tpu.dimension_semantics<parallel>, #tpu.dimension_semantics<parallel>], iteration_bounds = array<i64: 2, 2>, scalar_prefetch = 0 : i64, scratch_operands = 0 : i64, tpu.core_type = #tpu.core_type<tc>, window_params = [{transform_indices = @transform_0, window_bounds = array<i64: 8, 128>}, {transform_indices = @transform_1, window_bounds = array<i64: 1, 128, 128>}, {transform_indices = @transform_2, window_bounds = array<i64: 1, 8, 128>}, {transform_indices = @transform_3, window_bounds = array<i64: 1, 8, 128>}]} {
    %c0 = arith.constant 0 : index
    %c0_0 = arith.constant 0 : index
    %0 = vector.load %arg2[%c0, %c0_0] : memref<8x128xf32, #tpu.memory_space<vmem>>, vector<8x128xf32>
    %c0_1 = arith.constant 0 : index
    %c0_2 = arith.constant 0 : index
    %c0_3 = arith.constant 0 : index
    %1 = vector.load %arg3[%c0_1, %c0_2, %c0_3] : memref<1x128x128xf32, #tpu.memory_space<vmem>>, vector<1x128x128xf32>
    %2 = vector.shape_cast %1 : vector<1x128x128xf32> to vector<128x128xf32>
    %cst = arith.constant dense<0.000000e+00> : vector<8x128xf32>
    %3 = tpu.matmul %0, %2, %cst {dimension_numbers = #tpu.dot_dimension_numbers<[1], [0], [0], [1], [0, 0, 1, 1], [], []>} : vector<8x128xf32>, vector<128x128xf32>, vector<8x128xf32> -> vector<8x128xf32>
    %c0_4 = arith.constant 0 : index
    %c0_5 = arith.constant 0 : index
    %c0_6 = arith.constant 0 : index
    %4 = vector.load %arg4[%c0_4, %c0_5, %c0_6] : memref<1x8x128xf32, #tpu.memory_space<vmem>>, vector<1x8x128xf32>
    %5 = vector.shape_cast %4 : vector<1x8x128xf32> to vector<8x128xf32>
    %6 = vector.extract_strided_slice %5 {offsets = [0, 0], sizes = [1, 128], strides = [1, 1]} : vector<8x128xf32> to vector<1x128xf32>
    %7 = vector.broadcast %6 : vector<1x128xf32> to vector<8x128xf32>
    %8 = arith.addf %3, %7 : vector<8x128xf32>
    %cst_7 = arith.constant 0.000000e+00 : f32
    %9 = vector.broadcast %cst_7 : f32 to vector<8x128xf32>
    %10 = arith.maximumf %8, %9 : vector<8x128xf32>
    %c0_8 = arith.constant 0 : index
    %c0_9 = arith.constant 0 : index
    %c0_10 = arith.constant 0 : index
    %11 = vector.load %arg5[%c0_8, %c0_9, %c0_10] : memref<1x8x128xf32, #tpu.memory_space<vmem>>, vector<1x8x128xf32>
    %12 = vector.shape_cast %11 : vector<1x8x128xf32> to vector<8x128xf32>
    %13 = vector.shape_cast %10 : vector<8x128xf32> to vector<1x8x128xf32>
    tpu.vector_store %arg5[%c0_8, %c0_9, %c0_10], %13 {strides = array<i32>} : memref<1x8x128xf32, #tpu.memory_space<vmem>>, vector<1x8x128xf32>,
    return
  }
  func.func @transform_0(%arg0: i32, %arg1: i32) -> (i32, i32) {
    %c0_i32 = arith.constant 0 : i32
    %c0_i32_0 = arith.constant 0 : i32
    return %arg1, %c0_i32 : i32, i32
  }
  func.func @transform_1(%arg0: i32, %arg1: i32) -> (i32, i32, i32) {
    %c0_i32 = arith.constant 0 : i32
    %c0_i32_0 = arith.constant 0 : i32
    %c0_i32_1 = arith.constant 0 : i32
    return %arg0, %c0_i32, %c0_i32_0 : i32, i32, i32
  }
  func.func @transform_2(%arg0: i32, %arg1: i32) -> (i32, i32, i32) {
    %c0_i32 = arith.constant 0 : i32
    %c0_i32_0 = arith.constant 0 : i32
    %c0_i32_1 = arith.constant 0 : i32
    return %arg0, %c0_i32, %c0_i32_0 : i32, i32, i32
  }
  func.func @transform_3(%arg0: i32, %arg1: i32) -> (i32, i32, i32) {
    %c0_i32 = arith.constant 0 : i32
    %c0_i32_0 = arith.constant 0 : i32
    return %arg0, %arg1, %c0_i32 : i32, i32, i32
  }
}

</mosaic_0001>

<llo_original>
// kernel: tpu_custom_call.1
$region0: #{tpu_custom_call.1}
  #allocation0 [shape = 'u32[]', space=smem, size = 0x4, offset = 0x4, fixed_abs, tag = 'smem constant byte address 0x4 - core index']
  #allocation1 [shape = 'u32[144,128]{1,0:T(1,128)}', space=vmem, size = 0x12000, scoped, tag = 'internal scratch']
  %s0 = inlined_call_operand.hbm [shape: f32[16,128], index: 0, kind: input, shape index: {}]
  %s1 = inlined_call_operand.hbm [shape: f32[2,128,128], index: 1, kind: input, shape index: {}]
  %s2 = inlined_call_operand.hbm [shape: f32[2,8,128], index: 2, kind: input, shape index: {}]
  %s3 = inlined_call_operand.hbm [shape: f32[2,16,128], index: 3, kind: output, shape index: {}]
  %s4 = sld [smem:[#allocation0]]
  $region57: #{tpu_custom_call.1} parent=0
    _
  %s6 = ssub.s32 1, %s4
  %s7 = scalar_select 0, %s6, %s4
  $region1: #{tpu_custom_call.1} parent=0
    #allocation2 [shape = 'u8[8192]{0}', space=vmem, size = 0x2000, scoped, tag = 'input window, operand 0']
    #allocation3 [shape = 's32[2]{0}', space=sflag, size = 0x8, scoped, tag = 'scoped memory for tpu_custom_call.1']
    #allocation4 [shape = 's32[2]{0}', space=sflag, size = 0x8, scoped, tag = 'scoped memory for tpu_custom_call.1']
    #allocation5 [shape = 'u8[131072]{0}', space=vmem, size = 0x20000, scoped, tag = 'input window, operand 1']
    #allocation6 [shape = 's32[2]{0}', space=sflag, size = 0x8, scoped, tag = 'scoped memory for tpu_custom_call.1']
    #allocation7 [shape = 'u8[8192]{0}', space=vmem, size = 0x2000, scoped, tag = 'input window, operand 2']
    #allocation8 [shape = 'u8[8192]{0}', space=vmem, size = 0x2000, scoped, tag = 'output window, operand 0']
    %8 = vsyncpa [#allocation3], 0
    %s9 = scalar_lea.sflag [#allocation3], 1
    %10 = vsyncpa %s9, 0
    %11 = vsyncpa [#allocation6], 0
    %s12 = scalar_lea.sflag [#allocation6], 1
    %13 = vsyncpa %s12, 0
    %14 = vsyncpa [#allocation4], 0
    %s15 = scalar_lea.sflag [#allocation4], 1
    %16 = vsyncpa %s15, 0
    loop: start=0, step=1, limit=6
    $region2: #{tpu_custom_call.1} parent=1 // loop_pre_header
      _
    $region3: #{tpu_custom_call.1} parent=1 // loop_header
      %s18 = sphi 0, %s22
      %p19 = scmp.ge.s32.totalorder %s18, 6
      %s25 = sphi 0, %s37
      %s26 = sphi 0, %s33
      %s27 = sphi 0, %s25
      %s28 = sphi 0, %s26
      %s29 = sphi 0, %s27
      %s30 = sphi 0, %s28
      %s40 = sphi 0, %s42
      %s43 = sphi 0, %s40
      %s44 = sphi 0, %s43
      %s60 = sphi 0, %s44
      %s66 = sphi 0, %s68
      %s69 = sphi 0, %s66
      %s70 = sphi 0, %s69
      %s86 = sphi 0, %s70
      %s92 = sphi 0, %s94
      %s95 = sphi 0, %s92
      %s96 = sphi 0, %s95
      %s112 = sphi 0, %s96
      %s120 = sphi 0, %s122
      %s123 = sphi 0, %s120
      %s124 = sphi 0, %s123
      %s140 = sphi 0, %s124
    $region4: #{tpu_custom_call.1} parent=1 // loop_header_branch
      %21 = sbr.rel (%p19) target = $region8
    $region5: #{tpu_custom_call.1} parent=1 // loop_body
      %s23 = ssub.s32 %s18, 1
      %s24 = ssub.s32 %s18, 2
      %s31 = sadd.s32 1, %s26
      %p32 = scmp.ge.s32.totalorder %s31, 2
      %s33 = scalar_select %p32, 0, %s31
      %s34 = sadd.s32 1, %s25
      %s35 = scalar_select %p32, %s34, %s25
      %p36 = scmp.ge.s32.totalorder %s35, 2
      %s37 = scalar_select %p36, 0, %s35
      %s38 = ssub.s32 %s26, %s33
      %p39 = scmp.eq.s32.totalorder %s38, 0
      %s41 = sadd.s32 %s40, 1
      %s42 = scalar_select %p39, %s40, %s41
      %p45 = pneg %p39
      %p46 = scmp.eq.s32.totalorder %s18, 3
      %p47 = por %p45, %p46
      %p48 = scmp.ne.s32.totalorder %s40, %s43
      %p49 = scmp.eq.s32.totalorder %s18, 0
      %p50 = por %p48, %p49
      %p51 = scmp.ne.s32.totalorder %s40, %s43
      %p52 = scmp.eq.s32.totalorder %s23, 3
      %p53 = por %p51, %p52
      %p54 = scmp.ne.s32.totalorder %s43, %s44
      %p55 = scmp.eq.s32.totalorder %s23, 0
      %p56 = por %p54, %p55
      %p57 = scmp.ne.s32.totalorder %s43, %s44
      %p58 = scmp.eq.s32.totalorder %s24, 3
      %p59 = por %p57, %p58
      %p61 = scmp.ne.s32.totalorder %s44, %s60
      %p62 = scmp.eq.s32.totalorder %s24, 0
      %p63 = por %p61, %p62
      %s64 = ssub.s32 %s25, %s37
      %p65 = scmp.eq.s32.totalorder %s64, 0
      %s67 = sadd.s32 %s66, 1
      %s68 = scalar_select %p65, %s66, %s67
      %p71 = pneg %p65
      %p72 = scmp.eq.s32.totalorder %s18, 3
      %p73 = por %p71, %p72
      %p74 = scmp.ne.s32.totalorder %s66, %s69
      %p75 = scmp.eq.s32.totalorder %s18, 0
      %p76 = por %p74, %p75
      %p77 = scmp.ne.s32.totalorder %s66, %s69
      %p78 = scmp.eq.s32.totalorder %s23, 3
      %p79 = por %p77, %p78
      %p80 = scmp.ne.s32.totalorder %s69, %s70
      %p81 = scmp.eq.s32.totalorder %s23, 0
      %p82 = por %p80, %p81
      %p83 = scmp.ne.s32.totalorder %s69, %s70
      %p84 = scmp.eq.s32.totalorder %s24, 3
      %p85 = por %p83, %p84
      %p87 = scmp.ne.s32.totalorder %s70, %s86
      %p88 = scmp.eq.s32.totalorder %s24, 0
      %p89 = por %p87, %p88
      %s90 = ssub.s32 %s25, %s37
      %p91 = scmp.eq.s32.totalorder %s90, 0
      %s93 = sadd.s32 %s92, 1
      %s94 = scalar_select %p91, %s92, %s93
      %p97 = pneg %p91
      %p98 = scmp.eq.s32.totalorder %s18, 3
      %p99 = por %p97, %p98
      %p100 = scmp.ne.s32.totalorder %s92, %s95
      %p101 = scmp.eq.s32.totalorder %s18, 0
      %p102 = por %p100, %p101
      %p103 = scmp.ne.s32.totalorder %s92, %s95
      %p104 = scmp.eq.s32.totalorder %s23, 3
      %p105 = por %p103, %p104
      %p106 = scmp.ne.s32.totalorder %s95, %s96
      %p107 = scmp.eq.s32.totalorder %s23, 0
      %p108 = por %p106, %p107
      %p109 = scmp.ne.s32.totalorder %s95, %s96
      %p110 = scmp.eq.s32.totalorder %s24, 3
      %p111 = por %p109, %p110
      %p113 = scmp.ne.s32.totalorder %s96, %s112
      %p114 = scmp.eq.s32.totalorder %s24, 0
      %p115 = por %p113, %p114
      %s116 = ssub.s32 %s25, %s37
      %s117 = ssub.s32 %s26, %s33
      %s118 = sor.u32 %s116, %s117
      %p119 = scmp.eq.s32.totalorder %s118, 0
      %s121 = sadd.s32 %s120, 1
      %s122 = scalar_select %p119, %s120, %s121
      %p125 = pneg %p119
      %p126 = scmp.eq.s32.totalorder %s18, 3
      %p127 = por %p125, %p126
      %p128 = scmp.ne.s32.totalorder %s120, %s123
      %p129 = scmp.eq.s32.totalorder %s18, 0
      %p130 = por %p128, %p129
      %p131 = scmp.ne.s32.totalorder %s120, %s123
      %p132 = scmp.eq.s32.totalorder %s23, 3
      %p133 = por %p131, %p132
      %p134 = scmp.ne.s32.totalorder %s123, %s124
      %p135 = scmp.eq.s32.totalorder %s23, 0
      %p136 = por %p134, %p135
      %p137 = scmp.ne.s32.totalorder %s123, %s124
      %p138 = scmp.eq.s32.totalorder %s24, 3
      %p139 = por %p137, %p138
      %p141 = scmp.ne.s32.totalorder %s124, %s140
      %p142 = scmp.eq.s32.totalorder %s24, 0
      %p143 = por %p141, %p142
      %p144 = scmp.le.s32.totalorder 1, %s18
      %p145 = scmp.lt.s32.totalorder %s18, 5
      %p146 = pnand %p144, %p145
      %p147 = pneg %p146
      // Predicated region
      $region9: #{tpu_custom_call.1} parent=5 // pred_check
        _
      $region10: #{tpu_custom_call.1} parent=5 // pred_check_branch
        %149 = sbr.rel (%p146) target = $region12
      $region11: #{tpu_custom_call.1} parent=5 // pred_region
        %s150 = ssub.s32 %s18, 1
      $region12: #{tpu_custom_call.1} parent=5 // pred_fallthru
        _
      %p151 = scmp.lt.s32.totalorder %s18, 4
      // Predicated region
      $region13: #{tpu_custom_call.1} parent=5 // pred_check
        %p152 = pneg %p151
      $region14: #{tpu_custom_call.1} parent=5 // pred_check_branch
        %154 = sbr.rel (%p152) target = $region16
      $region15: #{tpu_custom_call.1} parent=5 // pred_region
        // Predicated region
        $region17: #{tpu_custom_call.1} parent=15 // pred_check
          %p155 = pneg %p50
        $region18: #{tpu_custom_call.1} parent=15 // pred_check_branch
          %157 = sbr.rel (%p155) target = $region20
        $region19: #{tpu_custom_call.1} parent=15 // pred_region
          %s158 = sand.u32 %s40, 1
          %s159 = scalar_lea.sflag [#allocation3], %s158
          %s160 = sand.u32 %s40, 1
          %s161 = smul.addr %s160, 8
          %s162 = scalar_lea.vmem [#allocation2], %s161
          %s164 = ssub.s32 128, 128
          %165 = vsyncadd %s159, %s164
          %s166 = smul.addr %s26, 128
          %s167 = scalar_lea.hbm %s0, %s166
          %s169 = sshll.u32 %s162, 4
          %s170 = int_to_ptr.vmem [resolvable:$true] %s169
          %172 = dma.hbm_to_vmem [thread:$0]  %s167, 128, %s170, %s159
        $region20: #{tpu_custom_call.1} parent=15 // pred_fallthru
          _
        // Predicated region
        $region21: #{tpu_custom_call.1} parent=15 // pred_check
          %p173 = pneg %p76
        $region22: #{tpu_custom_call.1} parent=15 // pred_check_branch
          %175 = sbr.rel (%p173) target = $region24
        $region23: #{tpu_custom_call.1} parent=15 // pred_region
          %s176 = sand.u32 %s18, 1
          %s177 = scalar_lea.sflag [#allocation6], %s176
          %s178 = sand.u32 %s66, 1
          %s179 = smul.addr %s178, 128
          %s180 = scalar_lea.vmem [#allocation5], %s179
          %s182 = ssub.s32 2048, 2048
          %183 = vsyncadd %s177, %s182
          %s184 = smul.addr %s25, 16
          %s185 = smul.addr %s184, 128
          %s186 = scalar_lea.hbm %s1, %s185
          %s187 = sshll.u32 %s180, 4
          %s188 = int_to_ptr.vmem [resolvable:$true] %s187
          %193 = dma.hbm_to_vmem [thread:$0]  %s186, 2048, %s188, %s177, 128, 128, 8
        $region24: #{tpu_custom_call.1} parent=15 // pred_fallthru
          _
        // Predicated region
        $region25: #{tpu_custom_call.1} parent=15 // pred_check
          %p194 = pneg %p102
        $region26: #{tpu_custom_call.1} parent=15 // pred_check_branch
          %196 = sbr.rel (%p194) target = $region28
        $region27: #{tpu_custom_call.1} parent=15 // pred_region
          %s197 = sand.u32 %s18, 1
          %s198 = scalar_lea.sflag [#allocation6], %s197
          %s199 = sand.u32 %s92, 1
          %s200 = smul.addr %s199, 8
          %s201 = scalar_lea.vmem [#allocation7], %s200
          %s203 = ssub.s32 128, 128
          %204 = vsyncadd %s198, %s203
          %s205 = smul.addr %s25, 128
          %s206 = scalar_lea.hbm %s2, %s205
          %s208 = sshll.u32 %s201, 4
          %s209 = int_to_ptr.vmem [resolvable:$true] %s208
          %211 = dma.hbm_to_vmem [thread:$0]  %s206, 128, %s209, %s198
        $region28: #{tpu_custom_call.1} parent=15 // pred_fallthru
          _
      $region16: #{tpu_custom_call.1} parent=5 // pred_fallthru
        _
      %p212 = scmp.le.s32.totalorder 1, %s18
      %p213 = scmp.lt.s32.totalorder %s18, 5
      %p214 = pnand %p212, %p213
      %p215 = pneg %p214
      // Predicated region
      $region29: #{tpu_custom_call.1} parent=5 // pred_check
        _
      $region30: #{tpu_custom_call.1} parent=5 // pred_check_branch
        %217 = sbr.rel (%p214) target = $region32
      $region31: #{tpu_custom_call.1} parent=5 // pred_region
        %s218 = ssub.s32 %s18, 1
        %s219 = sand.u32 %s43, 1
        %s220 = scalar_lea.sflag [#allocation3], %s219
        %s221 = sand.u32 %s43, 1
        %s222 = smul.addr %s221, 8
        %s223 = scalar_lea.vmem [#allocation2], %s222
        // Predicated region
        $region33: #{tpu_custom_call.1} parent=31 // pred_check
          %p224 = pneg %p56
        $region34: #{tpu_custom_call.1} parent=31 // pred_check_branch
          %226 = sbr.rel (%p224) target = $region36
        $region35: #{tpu_custom_call.1} parent=31 // pred_region
          %227 = dma.done %s220, 128
        $region36: #{tpu_custom_call.1} parent=31 // pred_fallthru
          _
        %s228 = sand.u32 %s23, 1
        %s229 = scalar_lea.sflag [#allocation6], %s228
        %s230 = sand.u32 %s69, 1
        %s231 = smul.addr %s230, 128
        %s232 = scalar_lea.vmem [#allocation5], %s231
        // Predicated region
        $region37: #{tpu_custom_call.1} parent=31 // pred_check
          %p233 = pneg %p82
        $region38: #{tpu_custom_call.1} parent=31 // pred_check_branch
          %235 = sbr.rel (%p233) target = $region40
        $region39: #{tpu_custom_call.1} parent=31 // pred_region
          %236 = dma.done %s229, 2048
        $region40: #{tpu_custom_call.1} parent=31 // pred_fallthru
          _
        %s237 = sand.u32 %s23, 1
        %s238 = scalar_lea.sflag [#allocation6], %s237
        %s239 = sand.u32 %s95, 1
        %s240 = smul.addr %s239, 8
        %s241 = scalar_lea.vmem [#allocation7], %s240
        // Predicated region
        $region41: #{tpu_custom_call.1} parent=31 // pred_check
          %p242 = pneg %p108
        $region42: #{tpu_custom_call.1} parent=31 // pred_check_branch
          %244 = sbr.rel (%p242) target = $region44
        $region43: #{tpu_custom_call.1} parent=31 // pred_region
          %245 = dma.done %s238, 128
        $region44: #{tpu_custom_call.1} parent=31 // pred_fallthru
          _
        %s246 = sand.u32 %s43, 1
        %s247 = scalar_lea.sflag [#allocation3], %s246
        %s248 = sand.u32 %s43, 1
        %s249 = smul.addr %s248, 8
        %s250 = scalar_lea.vmem [#allocation2], %s249
        %p251 = pneg %p56
        %p252 = pneg %p53
        %s253 = sand.u32 %s23, 1
        %s254 = scalar_lea.sflag [#allocation6], %s253
        %s255 = sand.u32 %s69, 1
        %s256 = smul.addr %s255, 128
        %s257 = scalar_lea.vmem [#allocation5], %s256
        %p258 = pneg %p82
        %p259 = pneg %p79
        %s260 = sand.u32 %s23, 1
        %s261 = scalar_lea.sflag [#allocation6], %s260
        %s262 = sand.u32 %s95, 1
        %s263 = smul.addr %s262, 8
        %s264 = scalar_lea.vmem [#allocation7], %s263
        %p265 = pneg %p108
        %p266 = pneg %p105
        %p267 = pneg %p136
        %p268 = pneg %p133
        %s269 = sand.u32 %s123, 1
        %s270 = scalar_lea.sflag [#allocation4], %s269
        %s271 = sand.u32 %s123, 1
        %s272 = smul.addr %s271, 8
        %s273 = scalar_lea.vmem [#allocation8], %s272
        %v274 = vld [vmem:[%s223] sm:$0xff]
        %v275 = vld [vmem:[%s232] sm:$0xff]
        %v276 = vld [vmem:[%s232 + $0x8] sm:$0xff]
        %v277 = vld [vmem:[%s232 + $0x10] sm:$0xff]
        %v278 = vld [vmem:[%s232 + $0x18] sm:$0xff]
        %v279 = vld [vmem:[%s232 + $0x20] sm:$0xff]
        %v280 = vld [vmem:[%s232 + $0x28] sm:$0xff]
        %v281 = vld [vmem:[%s232 + $0x30] sm:$0xff]
        %v282 = vld [vmem:[%s232 + $0x38] sm:$0xff]
        %v283 = vld [vmem:[%s232 + $0x40] sm:$0xff]
        %v284 = vld [vmem:[%s232 + $0x48] sm:$0xff]
        %v285 = vld [vmem:[%s232 + $0x50] sm:$0xff]
        %v286 = vld [vmem:[%s232 + $0x58] sm:$0xff]
        %v287 = vld [vmem:[%s232 + $0x60] sm:$0xff]
        %v288 = vld [vmem:[%s232 + $0x68] sm:$0xff]
        %v289 = vld [vmem:[%s232 + $0x70] sm:$0xff]
        %v290 = vld [vmem:[%s232 + $0x78] sm:$0xff]
        %v291 = vld [vmem:[%s241] sm:$0xff]
        %v292 = vlaneseq
        %v293 = vshrl.u32 %v292, 7
        %v294 = vsub.s32 0, %v293
        %v295 = vrot.slane %v291, %v294
        %296 = vmatprep.subr.mxu0 0.0
        %297 = vmatpush1.msra.mxu0 %v290
        %298 = vmatprep.subr.mxu0 0.0
        %299 = vmatpush1.msra.mxu0 %v289
        %300 = vmatprep.subr.mxu0 0.0
        %301 = vmatpush1.msra.mxu0 %v288
        %302 = vmatprep.subr.mxu0 0.0
        %303 = vmatpush1.msra.mxu0 %v287
        %304 = vmatprep.subr.mxu0 0.0
        %305 = vmatpush1.msra.mxu0 %v286
        %306 = vmatprep.subr.mxu0 0.0
        %307 = vmatpush1.msra.mxu0 %v285
        %308 = vmatprep.subr.mxu0 0.0
        %309 = vmatpush1.msra.mxu0 %v284
        %310 = vmatprep.subr.mxu0 0.0
        %311 = vmatpush1.msra.mxu0 %v283
        %312 = vmatprep.subr.mxu0 0.0
        %313 = vmatpush1.msra.mxu0 %v282
        %314 = vmatprep.subr.mxu0 0.0
        %315 = vmatpush1.msra.mxu0 %v281
        %316 = vmatprep.subr.mxu0 0.0
        %317 = vmatpush1.msra.mxu0 %v280
        %318 = vmatprep.subr.mxu0 0.0
        %319 = vmatpush1.msra.mxu0 %v279
        %320 = vmatprep.subr.mxu0 0.0
        %321 = vmatpush1.msra.mxu0 %v278
        %322 = vmatprep.subr.mxu0 0.0
        %323 = vmatpush1.msra.mxu0 %v277
        %324 = vmatprep.subr.mxu0 0.0
        %325 = vmatpush1.msra.mxu0 %v276
        %326 = vmatprep.subr.mxu0 0.0
        %327 = vmatpush1.msra.mxu0 %v275
        %328 = vmatprep.subr.mxu0 0.0
        %329 = vmatpush2.msra.mxu0 0.0
        %330 = vmatprep.subr.mxu0 0.0
        %331 = vmatpush2.msra.mxu0 0.0
        %332 = vmatprep.subr.mxu0 0.0
        %333 = vmatpush2.msra.mxu0 0.0
        %334 = vmatprep.subr.mxu0 0.0
        %335 = vmatpush2.msra.mxu0 0.0
        %336 = vmatprep.subr.mxu0 0.0
        %337 = vmatpush2.msra.mxu0 0.0
        %338 = vmatprep.subr.mxu0 0.0
        %339 = vmatpush2.msra.mxu0 0.0
        %340 = vmatprep.subr.mxu0 0.0
        %341 = vmatpush2.msra.mxu0 0.0
        %342 = vmatprep.subr.mxu0 0.0
        %343 = vmatpush2.msra.mxu0 0.0
        %344 = vmatprep.subr.mxu0 0.0
        %345 = vmatpush2.msra.mxu0 0.0
        %346 = vmatprep.subr.mxu0 0.0
        %347 = vmatpush2.msra.mxu0 0.0
        %348 = vmatprep.subr.mxu0 0.0
        %349 = vmatpush2.msra.mxu0 0.0
        %350 = vmatprep.subr.mxu0 0.0
        %351 = vmatpush2.msra.mxu0 0.0
        %352 = vmatprep.subr.mxu0 0.0
        %353 = vmatpush2.msra.mxu0 0.0
        %354 = vmatprep.subr.mxu0 0.0
        %355 = vmatpush2.msra.mxu0 0.0
        %356 = vmatprep.subr.mxu0 0.0
        %357 = vmatpush2.msra.mxu0 0.0
        %358 = vmatprep.subr.mxu0 0.0
        %359 = vmatpush2.msra.mxu0 0.0
        %360 = vmatprep.mubr.f32.mxu0 0.0
        %361 = vmatmul.mubr.f32.gmra.mxu0 %v274
        %v362 = vpop.f32.mrf.mxu0
        %v363 = vadd.f32 %v295, %v362
        %v364 = vpop.f32.mrf.mxu0
        %365 = vdwg.mxu0
        %v366 = vmax.f32 %v363, 0.0
        %367 = vst [vmem:[%s273] sm:$0xff] %v366
        %s368 = sand.u32 %s123, 1
        %s369 = scalar_lea.sflag [#allocation4], %s368
        %s370 = sand.u32 %s123, 1
        %s371 = smul.addr %s370, 8
        %s372 = scalar_lea.vmem [#allocation8], %s371
        // Predicated region
        $region45: #{tpu_custom_call.1} parent=31 // pred_check
          %p373 = pneg %p133
        $region46: #{tpu_custom_call.1} parent=31 // pred_check_branch
          %375 = sbr.rel (%p373) target = $region48
        $region47: #{tpu_custom_call.1} parent=31 // pred_region
          %s377 = ssub.s32 128, 128
          %378 = vsyncadd %s369, %s377
          %s379 = smul.addr %s27, 2
          %s380 = sadd.s32 %s28, %s379
          %s381 = smul.addr %s380, 128
          %s382 = scalar_lea.hbm %s3, %s381
          %s384 = sshll.u32 %s372, 4
          %s385 = int_to_ptr.vmem [resolvable:$true] %s384
          %387 = dma.vmem_to_hbm [thread:$0]  %s385, 128, %s382, %s369
        $region48: #{tpu_custom_call.1} parent=31 // pred_fallthru
          _
      $region32: #{tpu_custom_call.1} parent=5 // pred_fallthru
        _
      %p388 = scmp.le.s32.totalorder 2, %s18
      // Predicated region
      $region49: #{tpu_custom_call.1} parent=5 // pred_check
        %p389 = pneg %p388
      $region50: #{tpu_custom_call.1} parent=5 // pred_check_branch
        %391 = sbr.rel (%p389) target = $region52
      $region51: #{tpu_custom_call.1} parent=5 // pred_region
        %s392 = ssub.s32 %s18, 2
        // Predicated region
        $region53: #{tpu_custom_call.1} parent=51 // pred_check
          %p393 = pneg %p139
        $region54: #{tpu_custom_call.1} parent=51 // pred_check_branch
          %395 = sbr.rel (%p393) target = $region56
        $region55: #{tpu_custom_call.1} parent=51 // pred_region
          %s396 = sand.u32 %s124, 1
          %s397 = scalar_lea.sflag [#allocation4], %s396
          %s398 = sand.u32 %s124, 1
          %s399 = smul.addr %s398, 8
          %s400 = scalar_lea.vmem [#allocation8], %s399
          %401 = dma.done %s397, 128
        $region56: #{tpu_custom_call.1} parent=51 // pred_fallthru
          _
      $region52: #{tpu_custom_call.1} parent=5 // pred_fallthru
        _
    $region6: #{tpu_custom_call.1} parent=1 // loop_footer
      %s22 = sadd.s32 1, %s18
    $region7: #{tpu_custom_call.1} parent=1 // loop_footer_branch
      %17 = sbr.rel target = $region3
    $region8: #{tpu_custom_call.1} parent=1 // loop_exit
      _
    %402 = vsyncpa [#allocation3], 1
    %s403 = scalar_lea.sflag [#allocation3], 1
    %404 = vsyncpa %s403, 1
    %405 = vsyncpa [#allocation6], 1
    %s406 = scalar_lea.sflag [#allocation6], 1
    %407 = vsyncpa %s406, 1
    %408 = vsyncpa [#allocation4], 1
    %s409 = scalar_lea.sflag [#allocation4], 1
    %410 = vsyncpa %s409, 1

</llo_original>
